<compile_context>
chip_gen: v7x
topology: tpu7x:2x2x1
jax: 0.10.0
libtpu: 0.0.40
codegen_flags: <defaults>
</compile_context>

<pallas_src>
import jax
import jax.numpy as jnp
from jax.experimental import pallas as pl
from jax.experimental.pallas import tpu as pltpu

IN_FEATURES = 4
OUT_FEATURES = 3

LANE = 512      # lane-block width (multiple of 128) — lane-dense loads/stores
MAX_SUB = 256   # sublane groups per grid step -> 128K cols, ~3.5 MiB per step


def _cdiv(a, b):
    return -(-a // b)


def linear_kernel(w_ref, b_ref, x_ref, o_ref):
    # w_ref: (OUT, IN)   f32 in SMEM  (loop-invariant scalars, no per-step DMA)
    # b_ref: (OUT,)      f32 in SMEM
    # x_ref: (IN, S, L)  f32 in VMEM  (S on sublanes, L on lanes -> dense vregs)
    # o_ref: (OUT, S, L) f32 in VMEM
    for j in range(OUT_FEATURES):            # fully unrolled: 12 VPU FMAs total
        acc = x_ref[0] * w_ref[j, 0]
        for i in range(1, IN_FEATURES):
            acc = acc + x_ref[i] * w_ref[j, i]
        # Direct per-row, lane-dense store (no concat / relayout).
        o_ref[j] = (acc + b_ref[j]).astype(o_ref.dtype)


def simple_model_forward(x, weight, bias, *, lane=LANE, max_sub=MAX_SUB):
    """x: (B, 4) f32; weight: (3, 4) (PyTorch layout); bias: (3,) -> (B, 3)."""
    B = x.shape[0]
    if B == 0:  # guard the empty-grid edge case
        return jnp.zeros((0, OUT_FEATURES), dtype=x.dtype)

    # Feature-major layout so the kernel's last axis is batch (lane-dense).
    xt = x.T                                        # (IN, B)

    # Batch in units of `lane` columns; pick the sublane tile.
    n_groups = _cdiv(B, lane)
    if n_groups <= max_sub:
        sub = n_groups                              # single tile; block dim == full dim is OK
        n_tiles = 1
    else:
        sub = max_sub                               # multiple of 8
        n_tiles = _cdiv(n_groups, sub)
    n_groups_pad = n_tiles * sub
    b_pad = n_groups_pad * lane

    if b_pad != B:
        # Padded columns compute bias-only garbage and are sliced off below.
        xt = jnp.pad(xt, ((0, 0), (0, b_pad - B)))
    x3 = xt.reshape(IN_FEATURES, n_groups_pad, lane)   # free row-major reshape

    out3 = pl.pallas_call(
        linear_kernel,
        out_shape=jax.ShapeDtypeStruct((OUT_FEATURES, n_groups_pad, lane), x.dtype),
        grid_spec=pltpu.PrefetchScalarGridSpec(
            num_scalar_prefetch=0,
            grid=(n_tiles,),
            in_specs=[
                # Tiny params live whole in SMEM — never touch the VMEM pipeline.
                pl.BlockSpec(memory_space=pltpu.MemorySpace.SMEM),  # weight (3, 4)
                pl.BlockSpec(memory_space=pltpu.MemorySpace.SMEM),  # bias   (3,)
                # Activations: sublane+lane dense, default double-buffered tiles.
                pl.BlockSpec((IN_FEATURES, sub, lane), lambda t: (0, t, 0)),
            ],
            out_specs=pl.BlockSpec((OUT_FEATURES, sub, lane), lambda t: (0, t, 0)),
        ),
        compiler_params=pltpu.CompilerParams(
            # On v7x, switch the batch axis to pltpu.CORE_PARALLEL (or use
            # pl.core_map over create_tensorcore_mesh) to engage both TCs;
            # kept as plain "parallel" here so the script runs on any TPU gen.
            dimension_semantics=("parallel",),
        ),
    )(weight, bias, x3)

    # Free reshape back to (OUT, b_pad), drop batch padding, back to (B, OUT).
    out_t = out3.reshape(OUT_FEATURES, b_pad)[:, :B]
    return out_t.T


if __name__ == "__main__":
    key = jax.random.PRNGKey(0)
    kx, kw, kb = jax.random.split(key, 3)

    # Deterministic PyTorch-style init (uniform bound 1/sqrt(in_features)).
    bound = 1.0 / (IN_FEATURES ** 0.5)
    weight = jax.random.uniform(
        kw, (OUT_FEATURES, IN_FEATURES), minval=-bound, maxval=bound,
        dtype=jnp.float32)
    bias = jax.random.uniform(
        kb, (OUT_FEATURES,), minval=-bound, maxval=bound, dtype=jnp.float32)

    # Primary small-shape check, matching the nn.Linear(4, 3) spec.
    B = 2
    x = jax.random.normal(kx, (B, IN_FEATURES), dtype=jnp.float32)
    out = jax.block_until_ready(simple_model_forward(x, weight, bias))
    ref = x @ weight.T + bias
    assert out.shape == (B, OUT_FEATURES)
    assert jnp.allclose(out, ref, atol=1e-5, rtol=1e-5)

    # Secondary check exercising the multi-tile + padded-tail path with a
    # deliberately tiny sublane tile (sub=8 -> 2 grid steps, ragged batch).
    B2 = 4615
    x2 = jax.random.normal(kx, (B2, IN_FEATURES), dtype=jnp.float32)
    out2 = jax.block_until_ready(simple_model_forward(x2, weight, bias, max_sub=8))
    ref2 = x2 @ weight.T + bias
    assert out2.shape == (B2, OUT_FEATURES)
    assert jnp.allclose(out2, ref2, atol=1e-5, rtol=1e-5)

    print("KERNEL_OK")
</pallas_src>

<mosaic_0001>
module attributes {stable_mosaic.version = 11 : i64} {
  func.func @linear_kernel(%arg0: i32, %arg1: memref<3x4xf32, #tpu.memory_space<smem>>, %arg2: memref<3xf32, #tpu.memory_space<smem>>, %arg3: memref<4x1x512xf32, #tpu.memory_space<vmem>>, %arg4: memref<3x1x512xf32, #tpu.memory_space<vmem>>) attributes {dimension_semantics = [#tpu.dimension_semantics<parallel>], iteration_bounds = array<i64: 1>, scalar_prefetch = 0 : i64, scratch_operands = 0 : i64, tpu.core_type = #tpu.core_type<tc>, window_params = [{transform_indices = @transform_0, window_bounds = array<i64: 3, 4>}, {transform_indices = @transform_1, window_bounds = array<i64: 3>}, {transform_indices = @transform_2, window_bounds = array<i64: 4, 1, 512>}, {transform_indices = @transform_3, window_bounds = array<i64: 3, 1, 512>}]} {
    %c0 = arith.constant 0 : index
    %c0_0 = arith.constant 0 : index
    %c0_1 = arith.constant 0 : index
    %0 = vector.load %arg3[%c0, %c0_0, %c0_1] : memref<4x1x512xf32, #tpu.memory_space<vmem>>, vector<1x1x512xf32>
    %1 = vector.shape_cast %0 : vector<1x1x512xf32> to vector<1x512xf32>
    %c0_2 = arith.constant 0 : index
    %c0_3 = arith.constant 0 : index
    %2 = memref.load %arg1[%c0_2, %c0_3] : memref<3x4xf32, #tpu.memory_space<smem>>
    %3 = vector.broadcast %2 : f32 to vector<1x512xf32>
    %4 = arith.mulf %1, %3 : vector<1x512xf32>
    %c1 = arith.constant 1 : index
    %c0_4 = arith.constant 0 : index
    %c0_5 = arith.constant 0 : index
    %5 = vector.load %arg3[%c1, %c0_4, %c0_5] : memref<4x1x512xf32, #tpu.memory_space<vmem>>, vector<1x1x512xf32>
    %6 = vector.shape_cast %5 : vector<1x1x512xf32> to vector<1x512xf32>
    %c0_6 = arith.constant 0 : index
    %c1_7 = arith.constant 1 : index
    %7 = memref.load %arg1[%c0_6, %c1_7] : memref<3x4xf32, #tpu.memory_space<smem>>
    %8 = vector.broadcast %7 : f32 to vector<1x512xf32>
    %9 = arith.mulf %6, %8 : vector<1x512xf32>
    %10 = arith.addf %4, %9 : vector<1x512xf32>
    %c2 = arith.constant 2 : index
    %c0_8 = arith.constant 0 : index
    %c0_9 = arith.constant 0 : index
    %11 = vector.load %arg3[%c2, %c0_8, %c0_9] : memref<4x1x512xf32, #tpu.memory_space<vmem>>, vector<1x1x512xf32>
    %12 = vector.shape_cast %11 : vector<1x1x512xf32> to vector<1x512xf32>
    %c0_10 = arith.constant 0 : index
    %c2_11 = arith.constant 2 : index
    %13 = memref.load %arg1[%c0_10, %c2_11] : memref<3x4xf32, #tpu.memory_space<smem>>
    %14 = vector.broadcast %13 : f32 to vector<1x512xf32>
    %15 = arith.mulf %12, %14 : vector<1x512xf32>
    %16 = arith.addf %10, %15 : vector<1x512xf32>
    %c3 = arith.constant 3 : index
    %c0_12 = arith.constant 0 : index
    %c0_13 = arith.constant 0 : index
    %17 = vector.load %arg3[%c3, %c0_12, %c0_13] : memref<4x1x512xf32, #tpu.memory_space<vmem>>, vector<1x1x512xf32>
    %18 = vector.shape_cast %17 : vector<1x1x512xf32> to vector<1x512xf32>
    %c0_14 = arith.constant 0 : index
    %c3_15 = arith.constant 3 : index
    %19 = memref.load %arg1[%c0_14, %c3_15] : memref<3x4xf32, #tpu.memory_space<smem>>
    %20 = vector.broadcast %19 : f32 to vector<1x512xf32>
    %21 = arith.mulf %18, %20 : vector<1x512xf32>
    %22 = arith.addf %16, %21 : vector<1x512xf32>
    %c0_16 = arith.constant 0 : index
    %23 = memref.load %arg2[%c0_16] : memref<3xf32, #tpu.memory_space<smem>>
    %24 = vector.broadcast %23 : f32 to vector<1x512xf32>
    %25 = arith.addf %22, %24 : vector<1x512xf32>
    %c0_17 = arith.constant 0 : index
    %c0_18 = arith.constant 0 : index
    %c0_19 = arith.constant 0 : index
    %26 = vector.load %arg4[%c0_17, %c0_18, %c0_19] : memref<3x1x512xf32, #tpu.memory_space<vmem>>, vector<1x1x512xf32>
    %27 = vector.shape_cast %26 : vector<1x1x512xf32> to vector<1x512xf32>
    %28 = vector.shape_cast %25 : vector<1x512xf32> to vector<1x1x512xf32>
    tpu.vector_store %arg4[%c0_17, %c0_18, %c0_19], %28 {strides = array<i32>} : memref<3x1x512xf32, #tpu.memory_space<vmem>>, vector<1x1x512xf32>,
    %c0_20 = arith.constant 0 : index
    %c0_21 = arith.constant 0 : index
    %c0_22 = arith.constant 0 : index
    %29 = vector.load %arg3[%c0_20, %c0_21, %c0_22] : memref<4x1x512xf32, #tpu.memory_space<vmem>>, vector<1x1x512xf32>
    %30 = vector.shape_cast %29 : vector<1x1x512xf32> to vector<1x512xf32>
    %c1_23 = arith.constant 1 : index
    %c0_24 = arith.constant 0 : index
    %31 = memref.load %arg1[%c1_23, %c0_24] : memref<3x4xf32, #tpu.memory_space<smem>>
    %32 = vector.broadcast %31 : f32 to vector<1x512xf32>
    %33 = arith.mulf %30, %32 : vector<1x512xf32>
    %c1_25 = arith.constant 1 : index
    %c0_26 = arith.constant 0 : index
    %c0_27 = arith.constant 0 : index
    %34 = vector.load %arg3[%c1_25, %c0_26, %c0_27] : memref<4x1x512xf32, #tpu.memory_space<vmem>>, vector<1x1x512xf32>
    %35 = vector.shape_cast %34 : vector<1x1x512xf32> to vector<1x512xf32>
    %c1_28 = arith.constant 1 : index
    %c1_29 = arith.constant 1 : index
    %36 = memref.load %arg1[%c1_28, %c1_29] : memref<3x4xf32, #tpu.memory_space<smem>>
    %37 = vector.broadcast %36 : f32 to vector<1x512xf32>
    %38 = arith.mulf %35, %37 : vector<1x512xf32>
    %39 = arith.addf %33, %38 : vector<1x512xf32>
    %c2_30 = arith.constant 2 : index
    %c0_31 = arith.constant 0 : index
    %c0_32 = arith.constant 0 : index
    %40 = vector.load %arg3[%c2_30, %c0_31, %c0_32] : memref<4x1x512xf32, #tpu.memory_space<vmem>>, vector<1x1x512xf32>
    %41 = vector.shape_cast %40 : vector<1x1x512xf32> to vector<1x512xf32>
    %c1_33 = arith.constant 1 : index
    %c2_34 = arith.constant 2 : index
    %42 = memref.load %arg1[%c1_33, %c2_34] : memref<3x4xf32, #tpu.memory_space<smem>>
    %43 = vector.broadcast %42 : f32 to vector<1x512xf32>
    %44 = arith.mulf %41, %43 : vector<1x512xf32>
    %45 = arith.addf %39, %44 : vector<1x512xf32>
    %c3_35 = arith.constant 3 : index
    %c0_36 = arith.constant 0 : index
    %c0_37 = arith.constant 0 : index
    %46 = vector.load %arg3[%c3_35, %c0_36, %c0_37] : memref<4x1x512xf32, #tpu.memory_space<vmem>>, vector<1x1x512xf32>
    %47 = vector.shape_cast %46 : vector<1x1x512xf32> to vector<1x512xf32>
    %c1_38 = arith.constant 1 : index
    %c3_39 = arith.constant 3 : index
    %48 = memref.load %arg1[%c1_38, %c3_39] : memref<3x4xf32, #tpu.memory_space<smem>>
    %49 = vector.broadcast %48 : f32 to vector<1x512xf32>
    %50 = arith.mulf %47, %49 : vector<1x512xf32>
    %51 = arith.addf %45, %50 : vector<1x512xf32>
    %c1_40 = arith.constant 1 : index
    %52 = memref.load %arg2[%c1_40] : memref<3xf32, #tpu.memory_space<smem>>
    %53 = vector.broadcast %52 : f32 to vector<1x512xf32>
    %54 = arith.addf %51, %53 : vector<1x512xf32>
    %c1_41 = arith.constant 1 : index
    %c0_42 = arith.constant 0 : index
    %c0_43 = arith.constant 0 : index
    %55 = vector.load %arg4[%c1_41, %c0_42, %c0_43] : memref<3x1x512xf32, #tpu.memory_space<vmem>>, vector<1x1x512xf32>
    %56 = vector.shape_cast %55 : vector<1x1x512xf32> to vector<1x512xf32>
    %57 = vector.shape_cast %54 : vector<1x512xf32> to vector<1x1x512xf32>
    tpu.vector_store %arg4[%c1_41, %c0_42, %c0_43], %57 {strides = array<i32>} : memref<3x1x512xf32, #tpu.memory_space<vmem>>, vector<1x1x512xf32>,
    %c0_44 = arith.constant 0 : index
    %c0_45 = arith.constant 0 : index
    %c0_46 = arith.constant 0 : index
    %58 = vector.load %arg3[%c0_44, %c0_45, %c0_46] : memref<4x1x512xf32, #tpu.memory_space<vmem>>, vector<1x1x512xf32>
    %59 = vector.shape_cast %58 : vector<1x1x512xf32> to vector<1x512xf32>
    %c2_47 = arith.constant 2 : index
    %c0_48 = arith.constant 0 : index
    %60 = memref.load %arg1[%c2_47, %c0_48] : memref<3x4xf32, #tpu.memory_space<smem>>
    %61 = vector.broadcast %60 : f32 to vector<1x512xf32>
    %62 = arith.mulf %59, %61 : vector<1x512xf32>
    %c1_49 = arith.constant 1 : index
    %c0_50 = arith.constant 0 : index
    %c0_51 = arith.constant 0 : index
    %63 = vector.load %arg3[%c1_49, %c0_50, %c0_51] : memref<4x1x512xf32, #tpu.memory_space<vmem>>, vector<1x1x512xf32>
    %64 = vector.shape_cast %63 : vector<1x1x512xf32> to vector<1x512xf32>
    %c2_52 = arith.constant 2 : index
    %c1_53 = arith.constant 1 : index
    %65 = memref.load %arg1[%c2_52, %c1_53] : memref<3x4xf32, #tpu.memory_space<smem>>
    %66 = vector.broadcast %65 : f32 to vector<1x512xf32>
    %67 = arith.mulf %64, %66 : vector<1x512xf32>
    %68 = arith.addf %62, %67 : vector<1x512xf32>
    %c2_54 = arith.constant 2 : index
    %c0_55 = arith.constant 0 : index
    %c0_56 = arith.constant 0 : index
    %69 = vector.load %arg3[%c2_54, %c0_55, %c0_56] : memref<4x1x512xf32, #tpu.memory_space<vmem>>, vector<1x1x512xf32>
    %70 = vector.shape_cast %69 : vector<1x1x512xf32> to vector<1x512xf32>
    %c2_57 = arith.constant 2 : index
    %c2_58 = arith.constant 2 : index
    %71 = memref.load %arg1[%c2_57, %c2_58] : memref<3x4xf32, #tpu.memory_space<smem>>
    %72 = vector.broadcast %71 : f32 to vector<1x512xf32>
    %73 = arith.mulf %70, %72 : vector<1x512xf32>
    %74 = arith.addf %68, %73 : vector<1x512xf32>
    %c3_59 = arith.constant 3 : index
    %c0_60 = arith.constant 0 : index
    %c0_61 = arith.constant 0 : index
    %75 = vector.load %arg3[%c3_59, %c0_60, %c0_61] : memref<4x1x512xf32, #tpu.memory_space<vmem>>, vector<1x1x512xf32>
    %76 = vector.shape_cast %75 : vector<1x1x512xf32> to vector<1x512xf32>
    %c2_62 = arith.constant 2 : index
    %c3_63 = arith.constant 3 : index
    %77 = memref.load %arg1[%c2_62, %c3_63] : memref<3x4xf32, #tpu.memory_space<smem>>
    %78 = vector.broadcast %77 : f32 to vector<1x512xf32>
    %79 = arith.mulf %76, %78 : vector<1x512xf32>
    %80 = arith.addf %74, %79 : vector<1x512xf32>
    %c2_64 = arith.constant 2 : index
    %81 = memref.load %arg2[%c2_64] : memref<3xf32, #tpu.memory_space<smem>>
    %82 = vector.broadcast %81 : f32 to vector<1x512xf32>
    %83 = arith.addf %80, %82 : vector<1x512xf32>
    %c2_65 = arith.constant 2 : index
    %c0_66 = arith.constant 0 : index
    %c0_67 = arith.constant 0 : index
    %84 = vector.load %arg4[%c2_65, %c0_66, %c0_67] : memref<3x1x512xf32, #tpu.memory_space<vmem>>, vector<1x1x512xf32>
    %85 = vector.shape_cast %84 : vector<1x1x512xf32> to vector<1x512xf32>
    %86 = vector.shape_cast %83 : vector<1x512xf32> to vector<1x1x512xf32>
    tpu.vector_store %arg4[%c2_65, %c0_66, %c0_67], %86 {strides = array<i32>} : memref<3x1x512xf32, #tpu.memory_space<vmem>>, vector<1x1x512xf32>,
    return
  }
  func.func @transform_0(%arg0: i32) -> (i32, i32) {
    %c0_i32 = arith.constant 0 : i32
    %c0_i32_0 = arith.constant 0 : i32
    %c0_i32_1 = arith.constant 0 : i32
    return %c0_i32, %c0_i32_0 : i32, i32
  }
  func.func @transform_1(%arg0: i32) -> i32 {
    %c0_i32 = arith.constant 0 : i32
    %c0_i32_0 = arith.constant 0 : i32
    return %c0_i32 : i32
  }
  func.func @transform_2(%arg0: i32) -> (i32, i32, i32) {
    %c0_i32 = arith.constant 0 : i32
    %c0_i32_0 = arith.constant 0 : i32
    %c0_i32_1 = arith.constant 0 : i32
    return %c0_i32, %arg0, %c0_i32_0 : i32, i32, i32
  }
  func.func @transform_3(%arg0: i32) -> (i32, i32, i32) {
    %c0_i32 = arith.constant 0 : i32
    %c0_i32_0 = arith.constant 0 : i32
    %c0_i32_1 = arith.constant 0 : i32
    return %c0_i32, %arg0, %c0_i32_0 : i32, i32, i32
  }
}

</mosaic_0001>

<llo_original>
// kernel: tpu_custom_call.1
$region0: #{tpu_custom_call.1}
  #allocation0 [shape = 'u32[]', space=smem, size = 0x4, offset = 0x4, fixed_abs, tag = 'smem constant byte address 0x4 - core index']
  #allocation1 [shape = 'u32[144,128]{1,0:T(1,128)}', space=vmem, size = 0x12000, scoped, tag = 'internal scratch']
  %s0 = inlined_call_operand.hbm [shape: f32[3,4], index: 0, kind: input, shape index: {}]
  %s1 = inlined_call_operand.vmem [shape: f32[3], index: 1, kind: input, shape index: {}]
  %s2 = inlined_call_operand.hbm [shape: f32[4,1,512], index: 2, kind: input, shape index: {}]
  %s3 = inlined_call_operand.hbm [shape: f32[3,1,512], index: 3, kind: output, shape index: {}]
  %s4 = sld [smem:[#allocation0]]
  $region34: #{tpu_custom_call.1} parent=0
    _
  %s6 = ssub.s32 1, %s4
  %s7 = scalar_select 0, %s6, %s4
  $region1: #{tpu_custom_call.1} parent=0
    #allocation2 [shape = 'u8[2048]{0}', space=smem, size = 0x800, scoped, tag = 'input window, operand 0, single buffered']
    #allocation3 [shape = 's32[1]{0}', space=sflag, size = 0x4, scoped, tag = 'scoped memory for tpu_custom_call.1']
    #allocation4 [shape = 's32[1]{0}', space=sflag, size = 0x4, scoped, tag = 'scoped memory for tpu_custom_call.1']
    #allocation5 [shape = 's32[1]{0}', space=sflag, size = 0x4, scoped, tag = 'scoped memory for tpu_custom_call.1']
    #allocation6 [shape = 's32[1]{0}', space=sflag, size = 0x4, scoped, tag = 'scoped memory for tpu_custom_call.1']
    #allocation7 [shape = 'u8[512]{0}', space=smem, size = 0x200, scoped, tag = 'input window, operand 1, single buffered']
    #allocation8 [shape = 'u8[8192]{0}', space=vmem, size = 0x2000, scoped, tag = 'input window, operand 2, single buffered']
    #allocation9 [shape = 'u8[6144]{0}', space=vmem, size = 0x1800, scoped, tag = 'output window, operand 0, single buffered']
    %8 = vsyncpa [#allocation5], 0
    %9 = vsyncpa [#allocation6], 0
    %10 = vsyncpa [#allocation3], 0
    %11 = vsyncpa [#allocation4], 0
    // Predicated region
    $region2: #{tpu_custom_call.1} parent=1 // pred_check
      _
    $region3: #{tpu_custom_call.1} parent=1 // pred_check_branch
      %13 = sbr.rel (0) target = $region5
    $region4: #{tpu_custom_call.1} parent=1 // pred_region
      %s15 = ssub.s32 64, 64
      %16 = vsyncadd [#allocation5], %s15
      %19 = dma.hbm_to_smem %s0, 64, [#allocation2], [#allocation5]
    $region5: #{tpu_custom_call.1} parent=1 // pred_fallthru
      _
    // Predicated region
    $region6: #{tpu_custom_call.1} parent=1 // pred_check
      _
    $region7: #{tpu_custom_call.1} parent=1 // pred_check_branch
      %21 = sbr.rel (0) target = $region9
    $region8: #{tpu_custom_call.1} parent=1 // pred_region
      %s23 = ssub.s32 16, 16
      %24 = vsyncadd [#allocation6], %s23
      %s26 = sshll.u32 %s1, 4
      %s27 = int_to_ptr.vmem [resolvable:$true] %s26
      %29 = dma.vmem_to_smem %s27, 16, [#allocation7], [#allocation6]
    $region9: #{tpu_custom_call.1} parent=1 // pred_fallthru
      _
    // Predicated region
    $region10: #{tpu_custom_call.1} parent=1 // pred_check
      _
    $region11: #{tpu_custom_call.1} parent=1 // pred_check_branch
      %31 = sbr.rel (0) target = $region13
    $region12: #{tpu_custom_call.1} parent=1 // pred_region
      %s33 = ssub.s32 256, 256
      %34 = vsyncadd [#allocation3], %s33
      %s35 = sshll.u32 [#allocation8], 4
      %s36 = int_to_ptr.vmem [resolvable:$true] %s35
      %41 = dma.hbm_to_vmem [thread:$0]  %s2, 256, %s36, [#allocation3], 64, 64, 4
    $region13: #{tpu_custom_call.1} parent=1 // pred_fallthru
      _
    // Predicated region
    $region14: #{tpu_custom_call.1} parent=1 // pred_check
      _
    $region15: #{tpu_custom_call.1} parent=1 // pred_check_branch
      %43 = sbr.rel (0) target = $region17
    $region16: #{tpu_custom_call.1} parent=1 // pred_region
      %44 = dma.done [#allocation5], 64
    $region17: #{tpu_custom_call.1} parent=1 // pred_fallthru
      _
    // Predicated region
    $region18: #{tpu_custom_call.1} parent=1 // pred_check
      _
    $region19: #{tpu_custom_call.1} parent=1 // pred_check_branch
      %46 = sbr.rel (0) target = $region21
    $region20: #{tpu_custom_call.1} parent=1 // pred_region
      %47 = dma.done [#allocation6], 16
    $region21: #{tpu_custom_call.1} parent=1 // pred_fallthru
      _
    // Predicated region
    $region22: #{tpu_custom_call.1} parent=1 // pred_check
      _
    $region23: #{tpu_custom_call.1} parent=1 // pred_check_branch
      %49 = sbr.rel (0) target = $region25
    $region24: #{tpu_custom_call.1} parent=1 // pred_region
      %50 = dma.done [#allocation3], 256
    $region25: #{tpu_custom_call.1} parent=1 // pred_fallthru
      _
    %51 = sfence
    %v52 = vld [vmem:[#allocation8] sm:$0xf]
    %s53 = sld [smem:[#allocation2]]
    %v54 = vstv %s53
    %v55 = vmul.f32 %v52, %v54
    %s56 = scalar_lea.vmem [#allocation8], 4
    %v57 = vld [vmem:[%s56] sm:$0xf]
    %s58 = sld [smem:[#allocation2 + $0x1]]
    %v59 = vstv %s58
    %v60 = vmul.f32 %v57, %v59
    %v61 = vadd.f32 %v55, %v60
    %s62 = scalar_lea.vmem [#allocation8], 8
    %v63 = vld [vmem:[%s62] sm:$0xf]
    %s64 = sld [smem:[#allocation2 + $0x2]]
    %v65 = vstv %s64
    %v66 = vmul.f32 %v63, %v65
    %v67 = vadd.f32 %v61, %v66
    %s68 = scalar_lea.vmem [#allocation8], 12
    %v69 = vld [vmem:[%s68] sm:$0xf]
    %s70 = sld [smem:[#allocation2 + $0x3]]
    %v71 = vstv %s70
    %v72 = vmul.f32 %v69, %v71
    %v73 = vadd.f32 %v67, %v72
    %s74 = sld [smem:[#allocation7]]
    %v75 = vstv %s74
    %v76 = vadd.f32 %v73, %v75
    %v77 = vlaneseq
    %vm78 = vcmp.ge.s32.totalorder %v77, 0
    %vm79 = vcmp.lt.s32.totalorder %v77, 512
    %vm80 = vmand %vm78, %vm79
    %81 = vst.msk [vmem:[#allocation9] sm:$0xf] %vm80, %v76
    %v82 = vld [vmem:[#allocation8] sm:$0xf]
    %s83 = sld [smem:[#allocation2 + $0x80]]
    %v84 = vstv %s83
    %v85 = vmul.f32 %v82, %v84
    %v86 = vld [vmem:[%s56] sm:$0xf]
    %s87 = sld [smem:[#allocation2 + $0x81]]
    %v88 = vstv %s87
    %v89 = vmul.f32 %v86, %v88
    %v90 = vadd.f32 %v85, %v89
    %v91 = vld [vmem:[%s62] sm:$0xf]
    %s92 = sld [smem:[#allocation2 + $0x82]]
    %v93 = vstv %s92
    %v94 = vmul.f32 %v91, %v93
    %v95 = vadd.f32 %v90, %v94
    %v96 = vld [vmem:[%s68] sm:$0xf]
    %s97 = sld [smem:[#allocation2 + $0x83]]
    %v98 = vstv %s97
    %v99 = vmul.f32 %v96, %v98
    %v100 = vadd.f32 %v95, %v99
    %s101 = sld [smem:[#allocation7 + $0x1]]
    %v102 = vstv %s101
    %v103 = vadd.f32 %v100, %v102
    %s104 = scalar_lea.vmem [#allocation9], 4
    %105 = vst.msk [vmem:[%s104] sm:$0xf] %vm80, %v103
    %v106 = vld [vmem:[#allocation8] sm:$0xf]
    %s107 = sld [smem:[#allocation2 + $0x100]]
    %v108 = vstv %s107
    %v109 = vmul.f32 %v106, %v108
    %v110 = vld [vmem:[%s56] sm:$0xf]
    %s111 = sld [smem:[#allocation2 + $0x101]]
    %v112 = vstv %s111
    %v113 = vmul.f32 %v110, %v112
    %v114 = vadd.f32 %v109, %v113
    %v115 = vld [vmem:[%s62] sm:$0xf]
    %s116 = sld [smem:[#allocation2 + $0x102]]
    %v117 = vstv %s116
    %v118 = vmul.f32 %v115, %v117
    %v119 = vadd.f32 %v114, %v118
    %v120 = vld [vmem:[%s68] sm:$0xf]
    %s121 = sld [smem:[#allocation2 + $0x103]]
    %v122 = vstv %s121
    %v123 = vmul.f32 %v120, %v122
    %v124 = vadd.f32 %v119, %v123
    %s125 = sld [smem:[#allocation7 + $0x2]]
    %v126 = vstv %s125
    %v127 = vadd.f32 %v124, %v126
    %s128 = scalar_lea.vmem [#allocation9], 8
    %129 = vst.msk [vmem:[%s128] sm:$0xf] %vm80, %v127
    // Predicated region
    $region26: #{tpu_custom_call.1} parent=1 // pred_check
      _
    $region27: #{tpu_custom_call.1} parent=1 // pred_check_branch
      %131 = sbr.rel (0) target = $region29
    $region28: #{tpu_custom_call.1} parent=1 // pred_region
      %s133 = ssub.s32 192, 192
      %134 = vsyncadd [#allocation4], %s133
      %s135 = sshll.u32 [#allocation9], 4
      %s136 = int_to_ptr.vmem [resolvable:$true] %s135
      %141 = dma.vmem_to_hbm [thread:$0]  %s136, 192, %s3, [#allocation4], 64, 64, 4
    $region29: #{tpu_custom_call.1} parent=1 // pred_fallthru
      _
    // Predicated region
    $region30: #{tpu_custom_call.1} parent=1 // pred_check
      _
    $region31: #{tpu_custom_call.1} parent=1 // pred_check_branch
      %143 = sbr.rel (0) target = $region33
    $region32: #{tpu_custom_call.1} parent=1 // pred_region
      %144 = dma.done [#allocation4], 192
    $region33: #{tpu_custom_call.1} parent=1 // pred_fallthru
      _
    %145 = vsyncpa [#allocation3], 1
    %146 = vsyncpa [#allocation4], 1
    %147 = vsyncpa [#allocation5], 1
    %148 = vsyncpa [#allocation6], 1

</llo_original>
